<compile_context>
chip_gen: v7x
topology: tpu7x:2x2x1
jax: 0.10.0
libtpu: 0.0.40
codegen_flags: <defaults>
</compile_context>

<pallas_src>
import functools

import jax
import jax.numpy as jnp
from jax.experimental import pallas as pl
from jax.experimental.pallas import tpu as pltpu


def actnorm_kernel(x_ref, a_ref, b_ref, o_ref):
    # One broadcast multiply + one broadcast add per element; a_ref/b_ref are
    # (1, C_work) and broadcast along sublanes.
    o_ref[...] = x_ref[...] * a_ref[...] + b_ref[...]


def _pick_row_block(m_rows, c_work):
    """Largest multiple-of-8 divisor of m_rows within a conservative VMEM cap."""
    # x + out, double-buffered: 4 buffers of (tm, c_work) f32.  Keep ~8 MiB.
    cap = max(8, (8 * 1024 * 1024) // (c_work * 4 * 4))
    if m_rows <= cap:
        return m_rows
    tm = (cap // 8) * 8
    while tm >= 8 and m_rows % tm != 0:
        tm -= 8
    return tm if tm >= 8 else m_rows


@jax.jit
def actnorm_forward(x, a, bias):
    orig_shape = x.shape
    c = orig_shape[-1]
    m = 1
    for d in orig_shape[:-1]:
        m *= d
    x2 = x.reshape(m, c)

    # Lane-packing: fold `fold` consecutive rows into the lane axis when the
    # channel count is a small divisor of 128.  Exact because the array is
    # row-major contiguous; a/bias are tiled `fold` times to match.
    fold = 1
    if c < 128 and 128 % c == 0:
        fold = 128 // c
        while fold > 1 and m % fold != 0:
            fold //= 2
    mw, cw = m // fold, c * fold
    xw = x2.reshape(mw, cw)
    aw = jnp.tile(a.reshape(1, c).astype(x.dtype), (1, fold))
    bw = jnp.tile(bias.reshape(1, c).astype(x.dtype), (1, fold))

    tm = _pick_row_block(mw, cw)
    grid = (mw // tm,)

    out = pl.pallas_call(
        actnorm_kernel,
        out_shape=jax.ShapeDtypeStruct((mw, cw), x.dtype),
        grid_spec=pltpu.PrefetchScalarGridSpec(
            num_scalar_prefetch=0,
            grid=grid,
            in_specs=[
                pl.BlockSpec((tm, cw), lambda i: (i, 0)),   # x tile
                pl.BlockSpec((1, cw), lambda i: (0, 0)),    # a (broadcast)
                pl.BlockSpec((1, cw), lambda i: (0, 0)),    # bias (broadcast)
            ],
            out_specs=pl.BlockSpec((tm, cw), lambda i: (i, 0)),
        ),
        compiler_params=pltpu.CompilerParams(
            # v7x has 2 TensorCores; a parallel leading axis lets multi-tile
            # inputs shard across both.  Grid of (1,) is unaffected.
            dimension_semantics=("parallel",)),
    )(xw, aw, bw)

    return out.reshape(orig_shape)


if __name__ == "__main__":
    key = jax.random.PRNGKey(0)
    k0, k1, k2 = jax.random.split(key, 3)

    # Small shapes consistent with the module: last dim is `input_size`.
    B, C, H, W = 2, 4, 16, 16
    input_size = W

    x = jax.random.normal(k0, (B, C, H, W), jnp.float32)
    # Non-trivial params (a fresh module would be a=1, bias=0 == identity);
    # this actually exercises the broadcast affine.
    a = jax.random.uniform(k1, (input_size,), minval=0.5, maxval=1.5,
                           dtype=jnp.float32)
    bias = 0.1 * jax.random.normal(k2, (input_size,), jnp.float32)

    out = jax.block_until_ready(actnorm_forward(x, a, bias))

    # Plain-JAX mirror of the PyTorch forward:
    #   a.view(1,...,-1) * x + bias.view(1,...,-1)
    ref = a.reshape(1, 1, 1, -1) * x + bias.reshape(1, 1, 1, -1)

    assert out.shape == x.shape
    err = jnp.max(jnp.abs(out - ref))
    assert jnp.allclose(out, ref, rtol=1e-6, atol=1e-6), f"max abs err {err}"

    print("KERNEL_OK")
</pallas_src>

<mosaic_0001>
module attributes {stable_mosaic.version = 11 : i64} {
  func.func @actnorm_kernel(%arg0: i32, %arg1: memref<16x128xf32, #tpu.memory_space<vmem>>, %arg2: memref<1x128xf32, #tpu.memory_space<vmem>>, %arg3: memref<1x128xf32, #tpu.memory_space<vmem>>, %arg4: memref<16x128xf32, #tpu.memory_space<vmem>>) attributes {dimension_semantics = [#tpu.dimension_semantics<parallel>], iteration_bounds = array<i64: 1>, scalar_prefetch = 0 : i64, scratch_operands = 0 : i64, tpu.core_type = #tpu.core_type<tc>, window_params = [{transform_indices = @transform_0, window_bounds = array<i64: 16, 128>}, {pipeline_mode = #tpu.pipeline_mode<synchronous>, transform_indices = @transform_1, window_bounds = array<i64: 1, 128>}, {pipeline_mode = #tpu.pipeline_mode<synchronous>, transform_indices = @transform_2, window_bounds = array<i64: 1, 128>}, {transform_indices = @transform_3, window_bounds = array<i64: 16, 128>}]} {
    %c0 = arith.constant 0 : index
    %c0_0 = arith.constant 0 : index
    %0 = vector.load %arg1[%c0, %c0_0] : memref<16x128xf32, #tpu.memory_space<vmem>>, vector<16x128xf32>
    %c0_1 = arith.constant 0 : index
    %c0_2 = arith.constant 0 : index
    %1 = vector.load %arg2[%c0_1, %c0_2] : memref<1x128xf32, #tpu.memory_space<vmem>>, vector<1x128xf32>
    %2 = vector.broadcast %1 : vector<1x128xf32> to vector<16x128xf32>
    %3 = arith.mulf %0, %2 : vector<16x128xf32>
    %c0_3 = arith.constant 0 : index
    %c0_4 = arith.constant 0 : index
    %4 = vector.load %arg3[%c0_3, %c0_4] : memref<1x128xf32, #tpu.memory_space<vmem>>, vector<1x128xf32>
    %5 = vector.broadcast %4 : vector<1x128xf32> to vector<16x128xf32>
    %6 = arith.addf %3, %5 : vector<16x128xf32>
    %c0_5 = arith.constant 0 : index
    %c0_6 = arith.constant 0 : index
    %7 = vector.load %arg4[%c0_5, %c0_6] : memref<16x128xf32, #tpu.memory_space<vmem>>, vector<16x128xf32>
    tpu.vector_store %arg4[%c0_5, %c0_6], %6 {strides = array<i32>} : memref<16x128xf32, #tpu.memory_space<vmem>>, vector<16x128xf32>,
    return
  }
  func.func @transform_0(%arg0: i32) -> (i32, i32) {
    %c0_i32 = arith.constant 0 : i32
    %c0_i32_0 = arith.constant 0 : i32
    return %arg0, %c0_i32 : i32, i32
  }
  func.func @transform_1(%arg0: i32) -> (i32, i32) {
    %c0_i32 = arith.constant 0 : i32
    %c0_i32_0 = arith.constant 0 : i32
    %c0_i32_1 = arith.constant 0 : i32
    return %c0_i32, %c0_i32_0 : i32, i32
  }
  func.func @transform_2(%arg0: i32) -> (i32, i32) {
    %c0_i32 = arith.constant 0 : i32
    %c0_i32_0 = arith.constant 0 : i32
    %c0_i32_1 = arith.constant 0 : i32
    return %c0_i32, %c0_i32_0 : i32, i32
  }
  func.func @transform_3(%arg0: i32) -> (i32, i32) {
    %c0_i32 = arith.constant 0 : i32
    %c0_i32_0 = arith.constant 0 : i32
    return %arg0, %c0_i32 : i32, i32
  }
}

</mosaic_0001>

<llo_original>
// kernel: actnorm_forward.1
$region0: #{actnorm_forward.1}
  #allocation0 [shape = 'u32[]', space=smem, size = 0x4, offset = 0x4, fixed_abs, tag = 'smem constant byte address 0x4 - core index']
  #allocation1 [shape = 'u32[144,128]{1,0:T(1,128)}', space=vmem, size = 0x12000, scoped, tag = 'internal scratch']
  %s0 = inlined_call_operand.vmem [shape: f32[16,128], index: 0, kind: input, shape index: {}]
  %s1 = inlined_call_operand.vmem [shape: f32[1,128], index: 1, kind: input, shape index: {}]
  %s2 = inlined_call_operand.vmem [shape: f32[1,128], index: 2, kind: input, shape index: {}]
  %s3 = inlined_call_operand.vmem [shape: f32[16,128], index: 3, kind: output, shape index: {}]
  %s4 = sld [smem:[#allocation0]]
  $region22: #{actnorm_forward.1} parent=0
    _
  %s6 = ssub.s32 1, %s4
  %s7 = scalar_select 0, %s6, %s4
  // Predicated region
  $region2: #{actnorm_forward.1} parent=0 // pred_check
    _
  $region3: #{actnorm_forward.1} parent=0 // pred_check_branch
    %9 = sbr.rel (0) target = $region5
  $region4: #{actnorm_forward.1} parent=0 // pred_region
    _
  $region5: #{actnorm_forward.1} parent=0 // pred_fallthru
    _
  // Predicated region
  $region6: #{actnorm_forward.1} parent=0 // pred_check
    _
  $region7: #{actnorm_forward.1} parent=0 // pred_check_branch
    %11 = sbr.rel (0) target = $region9
  $region8: #{actnorm_forward.1} parent=0 // pred_region
    _
  $region9: #{actnorm_forward.1} parent=0 // pred_fallthru
    _
  // Predicated region
  $region10: #{actnorm_forward.1} parent=0 // pred_check
    _
  $region11: #{actnorm_forward.1} parent=0 // pred_check_branch
    %13 = sbr.rel (0) target = $region13
  $region12: #{actnorm_forward.1} parent=0 // pred_region
    _
  $region13: #{actnorm_forward.1} parent=0 // pred_fallthru
    _
  %v14 = vld [vmem:[%s0] sm:$0xff]
  %v15 = vld [vmem:[%s0 + $0x8] sm:$0xff]
  %v16 = vld [vmem:[%s1] sm:$0x1]
  %v18 = vlaneseq
  %v19 = vshrl.u32 %v18, 7
  %v20 = vsub.s32 0, %v19
  %v21 = vrot.slane %v16, %v20
  %v23 = vmul.f32 %v14, %v21
  %v24 = vmul.f32 %v15, %v21
  %v25 = vld [vmem:[%s2] sm:$0x1]
  %v27 = vlaneseq
  %v28 = vshrl.u32 %v27, 7
  %v29 = vsub.s32 0, %v28
  %v30 = vrot.slane %v25, %v29
  %v32 = vadd.f32 %v23, %v30
  %v33 = vadd.f32 %v24, %v30
  %34 = vst [vmem:[%s3] sm:$0xff] %v32
  %35 = vst [vmem:[%s3 + $0x8] sm:$0xff] %v33
  // Predicated region
  $region14: #{actnorm_forward.1} parent=0 // pred_check
    _
  $region15: #{actnorm_forward.1} parent=0 // pred_check_branch
    %37 = sbr.rel (0) target = $region17
  $region16: #{actnorm_forward.1} parent=0 // pred_region
    _
  $region17: #{actnorm_forward.1} parent=0 // pred_fallthru
    _
  // Predicated region
  $region18: #{actnorm_forward.1} parent=0 // pred_check
    _
  $region19: #{actnorm_forward.1} parent=0 // pred_check_branch
    %39 = sbr.rel (0) target = $region21
  $region20: #{actnorm_forward.1} parent=0 // pred_region
    _
  $region21: #{actnorm_forward.1} parent=0 // pred_fallthru
    _

</llo_original>
